<compile_context>
chip_gen: v6e
topology: v6e:2x2x1
jax: 0.10.0
libtpu: 0.0.40
codegen_flags: <defaults>
</compile_context>

<pallas_src>
import functools

import jax
import jax.numpy as jnp
from jax.experimental import pallas as pl
from jax.experimental.pallas import tpu as pltpu

EPS = 1e-5
_LANE = 128
_SUB = 8


def _round_up(x, m):
    return (x + m - 1) // m * m


def _vmem_capacity_bytes():
    try:
        info = pltpu.get_tpu_info()
        cap = getattr(info, "vmem_capacity_bytes", None)
        if cap:
            return int(cap)
    except Exception:
        pass
    return 128 * 1024 * 1024  # conservative fallback (v5e/v6e class)


def _pick_batch_tile(B, batch_tile):
    """Largest multiple-of-8 tile <= batch_tile that keeps padded dead rows small."""
    B8 = _round_up(B, _SUB)
    cap = _round_up(max(batch_tile, _SUB), _SUB)
    if B8 <= cap:
        return B8
    best_tb = cap
    best_waste = _round_up(B8, cap) - B8
    floor = max(_SUB, cap // 2)  # keep tiles large for the 256x256 MXU on v6e/v7x
    tb = cap - _SUB
    while tb >= floor and best_waste > 0:
        waste = _round_up(B8, tb) - B8
        if waste < best_waste:
            best_tb, best_waste = tb, waste
        tb -= _SUB
    return best_tb


def _block_spec(shape, index_map, buffer_count=None):
    """BlockSpec with an optional per-operand buffer-count hint.

    Falls back to a plain BlockSpec when this jax version does not expose
    pl.Buffered / the pipeline_mode kwarg (the hint only changes VMEM footprint /
    prefetch depth, never semantics)."""
    if buffer_count is not None and hasattr(pl, "Buffered"):
        try:
            return pl.BlockSpec(shape, index_map,
                                pipeline_mode=pl.Buffered(buffer_count))
        except TypeError:
            pass
    return pl.BlockSpec(shape, index_map)


def _decoder_kernel(x_ref,
                    w1_ref, g1_ref, bt1_ref,
                    w2_ref, g2_ref, bt2_ref,
                    w3_ref, b3_ref,
                    out_ref,
                    h1_ref, h2_ref, st1_ref, st2_ref, sc1_ref, sc2_ref,
                    *, tb, inv_b, b_real, need_mask):
    p = pl.program_id(0)          # phase axis (0/1/2), outermost -> strictly sequential
    t = pl.program_id(1)          # batch-tile axis

    def accumulate(st_ref, h):
        # Stats are taken from the f32 MXU result (before any bf16 scratch downcast),
        # so mean/var stay f32-exact even with a bf16 activation scratch.
        st_ref[0:1, :] += jnp.sum(h, axis=0, keepdims=True)        # sum
        st_ref[1:2, :] += jnp.sum(h * h, axis=0, keepdims=True)    # sum of squares

    def finalize(st_ref, g_ref, bt_ref, sc_ref):
        mu = st_ref[0:1, :] * inv_b
        # One-pass variance E[h^2] - mu^2 (f32). Note: can cancel badly if |mu|>>sigma;
        # fine for typical post-linear activations.
        var = jnp.maximum(st_ref[1:2, :] * inv_b - mu * mu, 0.0)
        scale = g_ref[...] * jax.lax.rsqrt(var + EPS)
        sc_ref[0:1, :] = scale                                      # folded BN scale
        sc_ref[1:2, :] = bt_ref[...] - mu * scale                   # folded BN shift

    # ---------------- phase 0: linear1 + stats of h1 ----------------
    @pl.when(p == 0)
    def _phase0():
        @pl.when(t == 0)
        def _init():
            st1_ref[...] = jnp.zeros_like(st1_ref)
            st2_ref[...] = jnp.zeros_like(st2_ref)

        # b1 omitted: BN's mean subtraction cancels it exactly.  Padded x rows are
        # exactly zero, so they contribute nothing to sum / sumsq -> no mask needed.
        h1 = jnp.dot(x_ref[...], w1_ref[...], preferred_element_type=jnp.float32)
        accumulate(st1_ref, h1)
        h1_ref[t] = h1.astype(h1_ref.dtype)

    # ------------- phase 1: bn1 + relu + linear2 + stats of h2 -------------
    @pl.when(p == 1)
    def _phase1():
        @pl.when(t == 0)
        def _fold1():
            finalize(st1_ref, g1_ref, bt1_ref, sc1_ref)

        h1 = h1_ref[t].astype(jnp.float32)
        a1 = jnp.maximum(h1 * sc1_ref[0:1, :] + sc1_ref[1:2, :], 0.0)
        if need_mask:      # trace-time constant: only compiled in when batch was padded
            # Zero padded rows once so h2 and its stats stay exact (b2 also omitted).
            rows = jax.lax.broadcasted_iota(jnp.int32, (tb, 1), 0) + t * tb
            a1 = a1 * (rows < b_real).astype(jnp.float32)
        h2 = jnp.dot(a1.astype(w2_ref.dtype), w2_ref[...],
                     preferred_element_type=jnp.float32)
        accumulate(st2_ref, h2)
        h2_ref[t] = h2.astype(h2_ref.dtype)

    # ---------------- phase 2: bn2 + relu + linear3 ----------------
    @pl.when(p == 2)
    def _phase2():
        @pl.when(t == 0)
        def _fold2():
            finalize(st2_ref, g2_ref, bt2_ref, sc2_ref)

        h2 = h2_ref[t].astype(jnp.float32)
        a2 = jnp.maximum(h2 * sc2_ref[0:1, :] + sc2_ref[1:2, :], 0.0)
        out = jnp.dot(a2.astype(w3_ref.dtype), w3_ref[...],
                      preferred_element_type=jnp.float32) + b3_ref[...]
        out_ref[...] = out.astype(out_ref.dtype)


def decoder_forward(x, params, *, matmul_dtype=jnp.bfloat16, batch_tile=256,
                    h_dtype=None):
    """x: (B, D_in) float32.  params: dict with w1..w3 (fan_in, fan_out), b*, g*, bt*."""
    B, D_in = x.shape
    H1 = params["w1"].shape[1]
    H2 = params["w2"].shape[1]
    D_out = params["w3"].shape[1]
    if h_dtype is None:
        h_dtype = matmul_dtype    # bf16 scratch halves the dominant VMEM term (v7x)

    # Lane-dense padding (128-multiple feature dims), adaptive sublane batch tiling.
    D_in_p = _round_up(D_in, _LANE)
    H1_p = _round_up(H1, _LANE)
    H2_p = _round_up(H2, _LANE)
    D_out_p = _round_up(D_out, _LANE)
    TB = _pick_batch_tile(B, batch_tile)
    B_p = _round_up(B, TB)
    T = B_p // TB

    def pad2(a, r, c, dtype):
        a = jnp.asarray(a, dtype)
        return jnp.pad(a, ((0, r - a.shape[0]), (0, c - a.shape[1])))

    xp = pad2(x, B_p, D_in_p, matmul_dtype)
    w1p = pad2(params["w1"], D_in_p, H1_p, matmul_dtype)
    w2p = pad2(params["w2"], H1_p, H2_p, matmul_dtype)
    w3p = pad2(params["w3"], H2_p, D_out_p, matmul_dtype)
    g1p = pad2(params["g1"], 1, H1_p, jnp.float32)
    bt1p = pad2(params["bt1"], 1, H1_p, jnp.float32)
    g2p = pad2(params["g2"], 1, H2_p, jnp.float32)
    bt2p = pad2(params["bt2"], 1, H2_p, jnp.float32)
    b3p = pad2(params["b3"], 1, D_out_p, jnp.float32)
    # b1 / b2 intentionally NOT passed: cancelled exactly by BN mean subtraction.

    mm_bytes = jnp.dtype(matmul_dtype).itemsize
    h_bytes = jnp.dtype(h_dtype).itemsize
    weight_bytes = (D_in_p * H1_p + H1_p * H2_p + H2_p * D_out_p) * mm_bytes
    vec_bytes = (2 * H1_p + 2 * H2_p + D_out_p) * 4

    # Generation-aware VMEM budget (~80% of physical: ~51 MiB on v7x, ~102 MiB on v6e).
    budget = (_vmem_capacity_bytes() * 4) // 5

    def vmem_estimate(x_bufs, w_bufs):
        return (x_bufs * TB * D_in_p * mm_bytes            # pipelined x tiles
                + 2 * TB * D_out_p * 4                     # pipelined out tiles
                + w_bufs * (weight_bytes + vec_bytes)      # resident weights / vectors
                + B_p * (H1_p + H2_p) * h_bytes            # full-batch h1/h2 scratch
                + 4 * (H1_p + H2_p) * 4)                   # stats + folded scale/shift

    def vmem_limit_for(est):
        return int(min(budget, max(32 * 1024 * 1024, est + 4 * 1024 * 1024)))

    cost = pl.CostEstimate(
        flops=2 * B_p * (D_in_p * H1_p + H1_p * H2_p + H2_p * D_out_p),
        transcendentals=2 * (H1_p + H2_p),
        bytes_accessed=(B_p * D_in_p * mm_bytes + weight_bytes + vec_bytes
                        + B_p * D_out_p * 4),
    )

    kernel = functools.partial(_decoder_kernel, tb=TB, inv_b=1.0 / B,
                               b_real=B, need_mask=(B_p != B))

    def build_and_run(use_buffer_hints):
        w_bufs = 1 if use_buffer_hints else 2   # constant index maps -> single buffer
        x_bufs = 3 if use_buffer_hints else 2   # deeper prefetch hides phase-0 fetch (v5e)

        def const_spec(shape):
            return _block_spec(shape, lambda p, t: (0, 0),
                               1 if use_buffer_hints else None)

        # x is only needed in phase 0; out is only written in phase 2.  Holding the
        # block index constant in the other phases avoids redundant DMA / writebacks.
        x_spec = _block_spec((TB, D_in_p),
                             lambda p, t: (jnp.where(p == 0, t, 0), 0),
                             3 if use_buffer_hints else None)
        out_spec = pl.BlockSpec((TB, D_out_p),
                                lambda p, t: (jnp.where(p == 2, t, 0), 0))

        call = pl.pallas_call(
            kernel,
            out_shape=jax.ShapeDtypeStruct((B_p, D_out_p), jnp.float32),
            grid_spec=pltpu.PrefetchScalarGridSpec(
                num_scalar_prefetch=0,
                grid=(3, T),                                  # (phase, batch tile)
                in_specs=[
                    x_spec,
                    const_spec((D_in_p, H1_p)), const_spec((1, H1_p)), const_spec((1, H1_p)),
                    const_spec((H1_p, H2_p)), const_spec((1, H2_p)), const_spec((1, H2_p)),
                    const_spec((H2_p, D_out_p)), const_spec((1, D_out_p)),
                ],
                out_specs=out_spec,
                scratch_shapes=[
                    pltpu.VMEM((T, TB, H1_p), h_dtype),       # pre-BN h1, full batch
                    pltpu.VMEM((T, TB, H2_p), h_dtype),       # pre-BN h2, full batch
                    pltpu.VMEM((2, H1_p), jnp.float32),       # [sum; sumsq] layer 1
                    pltpu.VMEM((2, H2_p), jnp.float32),       # [sum; sumsq] layer 2
                    pltpu.VMEM((2, H1_p), jnp.float32),       # folded [scale; shift] 1
                    pltpu.VMEM((2, H2_p), jnp.float32),       # folded [scale; shift] 2
                ],
            ),
            compiler_params=pltpu.CompilerParams(
                # phases are sequential and batch tiles share the stat accumulators.
                dimension_semantics=("arbitrary", "arbitrary"),
                vmem_limit_bytes=vmem_limit_for(vmem_estimate(x_bufs, w_bufs)),
            ),
            cost_estimate=cost,
        )
        out = call(xp, w1p, g1p, bt1p, w2p, g2p, bt2p, w3p, b3p)
        return jax.block_until_ready(out)

    try:
        out = build_and_run(True)
    except Exception:
        # jax / Mosaic without per-operand buffer-count support: rebuild with defaults.
        out = build_and_run(False)

    return out[:B, :D_out]


def init_params(key, D_in, H1, H2, D_out):
    ks = jax.random.split(key, 3)

    def linear_init(k, fan_in, fan_out):
        bound = 1.0 / jnp.sqrt(fan_in)
        kw, kb = jax.random.split(k)
        # stored as (fan_in, fan_out) == PyTorch weight (fan_out, fan_in) transposed
        w = jax.random.uniform(kw, (fan_in, fan_out), jnp.float32, -bound, bound)
        b = jax.random.uniform(kb, (1, fan_out), jnp.float32, -bound, bound)
        return w, b

    w1, b1 = linear_init(ks[0], D_in, H1)
    w2, b2 = linear_init(ks[1], H1, H2)
    w3, b3 = linear_init(ks[2], H2, D_out)
    return {
        "w1": w1, "b1": b1,
        "g1": jnp.ones((1, H1), jnp.float32), "bt1": jnp.zeros((1, H1), jnp.float32),
        "w2": w2, "b2": b2,
        "g2": jnp.ones((1, H2), jnp.float32), "bt2": jnp.zeros((1, H2), jnp.float32),
        "w3": w3, "b3": b3,
    }


def _reference(x, p, matmul_dtype=jnp.float32):
    def mm(a, w):
        return jnp.dot(a.astype(matmul_dtype), w.astype(matmul_dtype),
                       preferred_element_type=jnp.float32)

    def bn(h, g, b):
        mu = jnp.mean(h, axis=0, keepdims=True)
        var = jnp.mean((h - mu) ** 2, axis=0, keepdims=True)
        return (h - mu) / jnp.sqrt(var + EPS) * g + b

    h = jnp.maximum(bn(mm(x, p["w1"]) + p["b1"], p["g1"], p["bt1"]), 0.0)
    h = jnp.maximum(bn(mm(h, p["w2"]) + p["b2"], p["g2"], p["bt2"]), 0.0)
    return mm(h, p["w3"]) + p["b3"]


if __name__ == "__main__":
    B, D_in, H1, H2, D_out = 8, 32, 64, 48, 16

    key = jax.random.PRNGKey(0)
    k_x, k_p = jax.random.split(key)
    x = jax.random.normal(k_x, (B, D_in), jnp.float32)
    params = init_params(k_p, D_in, H1, H2, D_out)

    # 1) Exact f32 MXU path + f32 scratch vs f32 reference (tight check).
    out_f32 = jax.block_until_ready(decoder_forward(x, params, matmul_dtype=jnp.float32))
    ref_f32 = _reference(x, params, jnp.float32)
    assert out_f32.shape == (B, D_out)
    assert jnp.allclose(out_f32, ref_f32, atol=1e-3, rtol=1e-3), "f32 mismatch vs reference"

    # 2) bf16 MXU operands + bf16 activation scratch (v6e/v7x fast path; f32 stats).
    out_bf16 = jax.block_until_ready(decoder_forward(x, params, matmul_dtype=jnp.bfloat16))
    ref_bf16 = _reference(x, params, jnp.bfloat16)
    assert jnp.allclose(out_bf16, ref_bf16, atol=2e-2, rtol=2e-2), "bf16 mismatch vs reference"

    # 3) Multi-tile ragged batch (exercises adaptive TB, phased grid, last-tile mask).
    B2 = 20
    x2 = jax.random.normal(jax.random.PRNGKey(1), (B2, D_in), jnp.float32)
    out_mt = jax.block_until_ready(
        decoder_forward(x2, params, matmul_dtype=jnp.float32, batch_tile=8))
    ref_mt = _reference(x2, params, jnp.float32)
    assert out_mt.shape == (B2, D_out)
    assert jnp.allclose(out_mt, ref_mt, atol=1e-3, rtol=1e-3), "tiled mismatch vs reference"

    print("KERNEL_OK")
</pallas_src>

<mosaic_0001>
module attributes {stable_mosaic.version = 11 : i64} {
  func.func @_decoder_kernel(%arg0: i32, %arg1: i32, %arg2: memref<8x128xf32, #tpu.memory_space<vmem>>, %arg3: memref<128x128xf32, #tpu.memory_space<vmem>>, %arg4: memref<1x128xf32, #tpu.memory_space<vmem>>, %arg5: memref<1x128xf32, #tpu.memory_space<vmem>>, %arg6: memref<128x128xf32, #tpu.memory_space<vmem>>, %arg7: memref<1x128xf32, #tpu.memory_space<vmem>>, %arg8: memref<1x128xf32, #tpu.memory_space<vmem>>, %arg9: memref<128x128xf32, #tpu.memory_space<vmem>>, %arg10: memref<1x128xf32, #tpu.memory_space<vmem>>, %arg11: memref<8x128xf32, #tpu.memory_space<vmem>>, %arg12: memref<1x8x128xf32, #tpu.memory_space<vmem>>, %arg13: memref<1x8x128xf32, #tpu.memory_space<vmem>>, %arg14: memref<2x128xf32, #tpu.memory_space<vmem>>, %arg15: memref<2x128xf32, #tpu.memory_space<vmem>>, %arg16: memref<2x128xf32, #tpu.memory_space<vmem>>, %arg17: memref<2x128xf32, #tpu.memory_space<vmem>>) attributes {dimension_semantics = [#tpu.dimension_semantics<arbitrary>, #tpu.dimension_semantics<arbitrary>], iteration_bounds = array<i64: 3, 1>, scalar_prefetch = 0 : i64, scratch_operands = 6 : i64, tpu.core_type = #tpu.core_type<tc>, window_params = [{transform_indices = @transform_0, window_bounds = array<i64: 8, 128>}, {pipeline_mode = #tpu.pipeline_mode<synchronous>, transform_indices = @transform_1, window_bounds = array<i64: 128, 128>}, {pipeline_mode = #tpu.pipeline_mode<synchronous>, transform_indices = @transform_2, window_bounds = array<i64: 1, 128>}, {pipeline_mode = #tpu.pipeline_mode<synchronous>, transform_indices = @transform_3, window_bounds = array<i64: 1, 128>}, {pipeline_mode = #tpu.pipeline_mode<synchronous>, transform_indices = @transform_4, window_bounds = array<i64: 128, 128>}, {pipeline_mode = #tpu.pipeline_mode<synchronous>, transform_indices = @transform_5, window_bounds = array<i64: 1, 128>}, {pipeline_mode = #tpu.pipeline_mode<synchronous>, transform_indices = @transform_6, window_bounds = array<i64: 1, 128>}, {pipeline_mode = #tpu.pipeline_mode<synchronous>, transform_indices = @transform_7, window_bounds = array<i64: 128, 128>}, {pipeline_mode = #tpu.pipeline_mode<synchronous>, transform_indices = @transform_8, window_bounds = array<i64: 1, 128>}, {transform_indices = @transform_9, window_bounds = array<i64: 8, 128>}]} {
    %c0_i32 = arith.constant 0 : i32
    %0 = arith.cmpi eq, %arg0, %c0_i32 : i32
    %1 = arith.extui %0 : i1 to i32
    %c0_i32_0 = arith.constant 0 : i32
    %2 = arith.cmpi ne, %1, %c0_i32_0 : i32
    scf.if %2 {
      %c0_i32_3 = arith.constant 0 : i32
      %9 = arith.cmpi eq, %arg1, %c0_i32_3 : i32
      %10 = arith.extui %9 : i1 to i32
      %c0_i32_4 = arith.constant 0 : i32
      %11 = arith.cmpi ne, %10, %c0_i32_4 : i32
      scf.if %11 {
        %cst_19 = arith.constant 0.000000e+00 : f32
        %30 = vector.broadcast %cst_19 : f32 to vector<2x128xf32>
        %c0_20 = arith.constant 0 : index
        %c0_21 = arith.constant 0 : index
        %31 = vector.load %arg14[%c0_20, %c0_21] : memref<2x128xf32, #tpu.memory_space<vmem>>, vector<2x128xf32>
        tpu.vector_store %arg14[%c0_20, %c0_21], %30 {strides = array<i32>} : memref<2x128xf32, #tpu.memory_space<vmem>>, vector<2x128xf32>,
        %cst_22 = arith.constant 0.000000e+00 : f32
        %32 = vector.broadcast %cst_22 : f32 to vector<2x128xf32>
        %c0_23 = arith.constant 0 : index
        %c0_24 = arith.constant 0 : index
        %33 = vector.load %arg15[%c0_23, %c0_24] : memref<2x128xf32, #tpu.memory_space<vmem>>, vector<2x128xf32>
        tpu.vector_store %arg15[%c0_23, %c0_24], %32 {strides = array<i32>} : memref<2x128xf32, #tpu.memory_space<vmem>>, vector<2x128xf32>,
      } else {
      }
      %c0 = arith.constant 0 : index
      %c0_5 = arith.constant 0 : index
      %12 = vector.load %arg2[%c0, %c0_5] : memref<8x128xf32, #tpu.memory_space<vmem>>, vector<8x128xf32>
      %c0_6 = arith.constant 0 : index
      %c0_7 = arith.constant 0 : index
      %13 = vector.load %arg3[%c0_6, %c0_7] : memref<128x128xf32, #tpu.memory_space<vmem>>, vector<128x128xf32>
      %cst = arith.constant dense<0.000000e+00> : vector<8x128xf32>
      %14 = tpu.matmul %12, %13, %cst {dimension_numbers = #tpu.dot_dimension_numbers<[1], [0], [0], [1], [0, 0, 1, 1], [], []>} : vector<8x128xf32>, vector<128x128xf32>, vector<8x128xf32> -> vector<8x128xf32>
      %c0_8 = arith.constant 0 : index
      %c0_9 = arith.constant 0 : index
      %15 = vector.load %arg14[%c0_8, %c0_9] : memref<2x128xf32, #tpu.memory_space<vmem>>, vector<1x128xf32>
      %cst_10 = arith.constant dense<0.000000e+00> : vector<128xf32>
      %16 = vector.multi_reduction <add>, %14, %cst_10 [0] : vector<8x128xf32> to vector<128xf32>
      %17 = vector.shape_cast %16 : vector<128xf32> to vector<1x128xf32>
      %18 = arith.addf %15, %17 : vector<1x128xf32>
      %c0_11 = arith.constant 0 : index
      %c0_12 = arith.constant 0 : index
      %19 = vector.load %arg14[%c0_11, %c0_12] : memref<2x128xf32, #tpu.memory_space<vmem>>, vector<1x128xf32>
      tpu.vector_store %arg14[%c0_11, %c0_12], %18 {strides = array<i32>} : memref<2x128xf32, #tpu.memory_space<vmem>>, vector<1x128xf32>,
      %c1 = arith.constant 1 : index
      %c0_13 = arith.constant 0 : index
      %20 = vector.load %arg14[%c1, %c0_13] : memref<2x128xf32, #tpu.memory_space<vmem>>, vector<1x128xf32>
      %21 = arith.mulf %14, %14 : vector<8x128xf32>
      %cst_14 = arith.constant dense<0.000000e+00> : vector<128xf32>
      %22 = vector.multi_reduction <add>, %21, %cst_14 [0] : vector<8x128xf32> to vector<128xf32>
      %23 = vector.shape_cast %22 : vector<128xf32> to vector<1x128xf32>
      %24 = arith.addf %20, %23 : vector<1x128xf32>
      %c1_15 = arith.constant 1 : index
      %c0_16 = arith.constant 0 : index
      %25 = vector.load %arg14[%c1_15, %c0_16] : memref<2x128xf32, #tpu.memory_space<vmem>>, vector<1x128xf32>
      tpu.vector_store %arg14[%c1_15, %c0_16], %24 {strides = array<i32>} : memref<2x128xf32, #tpu.memory_space<vmem>>, vector<1x128xf32>,
      %26 = arith.index_cast %arg1 : i32 to index
      %c0_17 = arith.constant 0 : index
      %c0_18 = arith.constant 0 : index
      %27 = vector.load %arg12[%26, %c0_17, %c0_18] : memref<1x8x128xf32, #tpu.memory_space<vmem>>, vector<1x8x128xf32>
      %28 = vector.shape_cast %27 : vector<1x8x128xf32> to vector<8x128xf32>
      %29 = vector.shape_cast %14 : vector<8x128xf32> to vector<1x8x128xf32>
      tpu.vector_store %arg12[%26, %c0_17, %c0_18], %29 {strides = array<i32>} : memref<1x8x128xf32, #tpu.memory_space<vmem>>, vector<1x8x128xf32>,
    } else {
    }
    %c1_i32 = arith.constant 1 : i32
    %3 = arith.cmpi eq, %arg0, %c1_i32 : i32
    %4 = arith.extui %3 : i1 to i32
    %c0_i32_1 = arith.constant 0 : i32
    %5 = arith.cmpi ne, %4, %c0_i32_1 : i32
    scf.if %5 {
      %c0_i32_3 = arith.constant 0 : i32
      %9 = arith.cmpi eq, %arg1, %c0_i32_3 : i32
      %10 = arith.extui %9 : i1 to i32
      %c0_i32_4 = arith.constant 0 : i32
      %11 = arith.cmpi ne, %10, %c0_i32_4 : i32
      scf.if %11 {
        %c0_24 = arith.constant 0 : index
        %c0_25 = arith.constant 0 : index
        %40 = vector.load %arg14[%c0_24, %c0_25] : memref<2x128xf32, #tpu.memory_space<vmem>>, vector<1x128xf32>
        %cst_26 = arith.constant 1.250000e-01 : f32
        %41 = vector.broadcast %cst_26 : f32 to vector<1x128xf32>
        %42 = arith.mulf %40, %41 : vector<1x128xf32>
        %c1_27 = arith.constant 1 : index
        %c0_28 = arith.constant 0 : index
        %43 = vector.load %arg14[%c1_27, %c0_28] : memref<2x128xf32, #tpu.memory_space<vmem>>, vector<1x128xf32>
        %cst_29 = arith.constant 1.250000e-01 : f32
        %44 = vector.broadcast %cst_29 : f32 to vector<1x128xf32>
        %45 = arith.mulf %43, %44 : vector<1x128xf32>
        %46 = arith.mulf %42, %42 : vector<1x128xf32>
        %47 = arith.subf %45, %46 : vector<1x128xf32>
        %cst_30 = arith.constant 0.000000e+00 : f32
        %48 = vector.broadcast %cst_30 : f32 to vector<1x128xf32>
        %49 = arith.maximumf %47, %48 : vector<1x128xf32>
        %c0_31 = arith.constant 0 : index
        %c0_32 = arith.constant 0 : index
        %50 = vector.load %arg4[%c0_31, %c0_32] : memref<1x128xf32, #tpu.memory_space<vmem>>, vector<1x128xf32>
        %cst_33 = arith.constant 9.99999974E-6 : f32
        %51 = vector.broadcast %cst_33 : f32 to vector<1x128xf32>
        %52 = arith.addf %49, %51 : vector<1x128xf32>
        %53 = math.rsqrt %52 : vector<1x128xf32>
        %54 = arith.mulf %50, %53 : vector<1x128xf32>
        %c0_34 = arith.constant 0 : index
        %c0_35 = arith.constant 0 : index
        %55 = vector.load %arg16[%c0_34, %c0_35] : memref<2x128xf32, #tpu.memory_space<vmem>>, vector<1x128xf32>
        tpu.vector_store %arg16[%c0_34, %c0_35], %54 {strides = array<i32>} : memref<2x128xf32, #tpu.memory_space<vmem>>, vector<1x128xf32>,
        %c0_36 = arith.constant 0 : index
        %c0_37 = arith.constant 0 : index
        %56 = vector.load %arg5[%c0_36, %c0_37] : memref<1x128xf32, #tpu.memory_space<vmem>>, vector<1x128xf32>
        %57 = arith.mulf %42, %54 : vector<1x128xf32>
        %58 = arith.subf %56, %57 : vector<1x128xf32>
        %c1_38 = arith.constant 1 : index
        %c0_39 = arith.constant 0 : index
        %59 = vector.load %arg16[%c1_38, %c0_39] : memref<2x128xf32, #tpu.memory_space<vmem>>, vector<1x128xf32>
        tpu.vector_store %arg16[%c1_38, %c0_39], %58 {strides = array<i32>} : memref<2x128xf32, #tpu.memory_space<vmem>>, vector<1x128xf32>,
      } else {
      }
      %12 = arith.index_cast %arg1 : i32 to index
      %c0 = arith.constant 0 : index
      %c0_5 = arith.constant 0 : index
      %13 = vector.load %arg12[%12, %c0, %c0_5] : memref<1x8x128xf32, #tpu.memory_space<vmem>>, vector<1x8x128xf32>
      %14 = vector.shape_cast %13 : vector<1x8x128xf32> to vector<8x128xf32>
      %c0_6 = arith.constant 0 : index
      %c0_7 = arith.constant 0 : index
      %15 = vector.load %arg16[%c0_6, %c0_7] : memref<2x128xf32, #tpu.memory_space<vmem>>, vector<1x128xf32>
      %16 = vector.broadcast %15 : vector<1x128xf32> to vector<8x128xf32>
      %17 = arith.mulf %14, %16 : vector<8x128xf32>
      %c1 = arith.constant 1 : index
      %c0_8 = arith.constant 0 : index
      %18 = vector.load %arg16[%c1, %c0_8] : memref<2x128xf32, #tpu.memory_space<vmem>>, vector<1x128xf32>
      %19 = vector.broadcast %18 : vector<1x128xf32> to vector<8x128xf32>
      %20 = arith.addf %17, %19 : vector<8x128xf32>
      %cst = arith.constant 0.000000e+00 : f32
      %21 = vector.broadcast %cst : f32 to vector<8x128xf32>
      %22 = arith.maximumf %20, %21 : vector<8x128xf32>
      %c0_9 = arith.constant 0 : index
      %c0_10 = arith.constant 0 : index
      %23 = vector.load %arg6[%c0_9, %c0_10] : memref<128x128xf32, #tpu.memory_space<vmem>>, vector<128x128xf32>
      %cst_11 = arith.constant dense<0.000000e+00> : vector<8x128xf32>
      %24 = tpu.matmul %22, %23, %cst_11 {dimension_numbers = #tpu.dot_dimension_numbers<[1], [0], [0], [1], [0, 0, 1, 1], [], []>} : vector<8x128xf32>, vector<128x128xf32>, vector<8x128xf32> -> vector<8x128xf32>
      %c0_12 = arith.constant 0 : index
      %c0_13 = arith.constant 0 : index
      %25 = vector.load %arg15[%c0_12, %c0_13] : memref<2x128xf32, #tpu.memory_space<vmem>>, vector<1x128xf32>
      %cst_14 = arith.constant dense<0.000000e+00> : vector<128xf32>
      %26 = vector.multi_reduction <add>, %24, %cst_14 [0] : vector<8x128xf32> to vector<128xf32>
      %27 = vector.shape_cast %26 : vector<128xf32> to vector<1x128xf32>
      %28 = arith.addf %25, %27 : vector<1x128xf32>
      %c0_15 = arith.constant 0 : index
      %c0_16 = arith.constant 0 : index
      %29 = vector.load %arg15[%c0_15, %c0_16] : memref<2x128xf32, #tpu.memory_space<vmem>>, vector<1x128xf32>
      tpu.vector_store %arg15[%c0_15, %c0_16], %28 {strides = array<i32>} : memref<2x128xf32, #tpu.memory_space<vmem>>, vector<1x128xf32>,
      %c1_17 = arith.constant 1 : index
      %c0_18 = arith.constant 0 : index
      %30 = vector.load %arg15[%c1_17, %c0_18] : memref<2x128xf32, #tpu.memory_space<vmem>>, vector<1x128xf32>
      %31 = arith.mulf %24, %24 : vector<8x128xf32>
      %cst_19 = arith.constant dense<0.000000e+00> : vector<128xf32>
      %32 = vector.multi_reduction <add>, %31, %cst_19 [0] : vector<8x128xf32> to vector<128xf32>
      %33 = vector.shape_cast %32 : vector<128xf32> to vector<1x128xf32>
      %34 = arith.addf %30, %33 : vector<1x128xf32>
      %c1_20 = arith.constant 1 : index
      %c0_21 = arith.constant 0 : index
      %35 = vector.load %arg15[%c1_20, %c0_21] : memref<2x128xf32, #tpu.memory_space<vmem>>, vector<1x128xf32>
      tpu.vector_store %arg15[%c1_20, %c0_21], %34 {strides = array<i32>} : memref<2x128xf32, #tpu.memory_space<vmem>>, vector<1x128xf32>,
      %36 = arith.index_cast %arg1 : i32 to index
      %c0_22 = arith.constant 0 : index
      %c0_23 = arith.constant 0 : index
      %37 = vector.load %arg13[%36, %c0_22, %c0_23] : memref<1x8x128xf32, #tpu.memory_space<vmem>>, vector<1x8x128xf32>
      %38 = vector.shape_cast %37 : vector<1x8x128xf32> to vector<8x128xf32>
      %39 = vector.shape_cast %24 : vector<8x128xf32> to vector<1x8x128xf32>
      tpu.vector_store %arg13[%36, %c0_22, %c0_23], %39 {strides = array<i32>} : memref<1x8x128xf32, #tpu.memory_space<vmem>>, vector<1x8x128xf32>,
    } else {
    }
    %c2_i32 = arith.constant 2 : i32
    %6 = arith.cmpi eq, %arg0, %c2_i32 : i32
    %7 = arith.extui %6 : i1 to i32
    %c0_i32_2 = arith.constant 0 : i32
    %8 = arith.cmpi ne, %7, %c0_i32_2 : i32
    scf.if %8 {
      %c0_i32_3 = arith.constant 0 : i32
      %9 = arith.cmpi eq, %arg1, %c0_i32_3 : i32
      %10 = arith.extui %9 : i1 to i32
      %c0_i32_4 = arith.constant 0 : i32
      %11 = arith.cmpi ne, %10, %c0_i32_4 : i32
      scf.if %11 {
        %c0_16 = arith.constant 0 : index
        %c0_17 = arith.constant 0 : index
        %29 = vector.load %arg15[%c0_16, %c0_17] : memref<2x128xf32, #tpu.memory_space<vmem>>, vector<1x128xf32>
        %cst_18 = arith.constant 1.250000e-01 : f32
        %30 = vector.broadcast %cst_18 : f32 to vector<1x128xf32>
        %31 = arith.mulf %29, %30 : vector<1x128xf32>
        %c1_19 = arith.constant 1 : index
        %c0_20 = arith.constant 0 : index
        %32 = vector.load %arg15[%c1_19, %c0_20] : memref<2x128xf32, #tpu.memory_space<vmem>>, vector<1x128xf32>
        %cst_21 = arith.constant 1.250000e-01 : f32
        %33 = vector.broadcast %cst_21 : f32 to vector<1x128xf32>
        %34 = arith.mulf %32, %33 : vector<1x128xf32>
        %35 = arith.mulf %31, %31 : vector<1x128xf32>
        %36 = arith.subf %34, %35 : vector<1x128xf32>
        %cst_22 = arith.constant 0.000000e+00 : f32
        %37 = vector.broadcast %cst_22 : f32 to vector<1x128xf32>
        %38 = arith.maximumf %36, %37 : vector<1x128xf32>
        %c0_23 = arith.constant 0 : index
        %c0_24 = arith.constant 0 : index
        %39 = vector.load %arg7[%c0_23, %c0_24] : memref<1x128xf32, #tpu.memory_space<vmem>>, vector<1x128xf32>
        %cst_25 = arith.constant 9.99999974E-6 : f32
        %40 = vector.broadcast %cst_25 : f32 to vector<1x128xf32>
        %41 = arith.addf %38, %40 : vector<1x128xf32>
        %42 = math.rsqrt %41 : vector<1x128xf32>
        %43 = arith.mulf %39, %42 : vector<1x128xf32>
        %c0_26 = arith.constant 0 : index
        %c0_27 = arith.constant 0 : index
        %44 = vector.load %arg17[%c0_26, %c0_27] : memref<2x128xf32, #tpu.memory_space<vmem>>, vector<1x128xf32>
        tpu.vector_store %arg17[%c0_26, %c0_27], %43 {strides = array<i32>} : memref<2x128xf32, #tpu.memory_space<vmem>>, vector<1x128xf32>,
        %c0_28 = arith.constant 0 : index
        %c0_29 = arith.constant 0 : index
        %45 = vector.load %arg8[%c0_28, %c0_29] : memref<1x128xf32, #tpu.memory_space<vmem>>, vector<1x128xf32>
        %46 = arith.mulf %31, %43 : vector<1x128xf32>
        %47 = arith.subf %45, %46 : vector<1x128xf32>
        %c1_30 = arith.constant 1 : index
        %c0_31 = arith.constant 0 : index
        %48 = vector.load %arg17[%c1_30, %c0_31] : memref<2x128xf32, #tpu.memory_space<vmem>>, vector<1x128xf32>
        tpu.vector_store %arg17[%c1_30, %c0_31], %47 {strides = array<i32>} : memref<2x128xf32, #tpu.memory_space<vmem>>, vector<1x128xf32>,
      } else {
      }
      %12 = arith.index_cast %arg1 : i32 to index
      %c0 = arith.constant 0 : index
      %c0_5 = arith.constant 0 : index
      %13 = vector.load %arg13[%12, %c0, %c0_5] : memref<1x8x128xf32, #tpu.memory_space<vmem>>, vector<1x8x128xf32>
      %14 = vector.shape_cast %13 : vector<1x8x128xf32> to vector<8x128xf32>
      %c0_6 = arith.constant 0 : index
      %c0_7 = arith.constant 0 : index
      %15 = vector.load %arg17[%c0_6, %c0_7] : memref<2x128xf32, #tpu.memory_space<vmem>>, vector<1x128xf32>
      %16 = vector.broadcast %15 : vector<1x128xf32> to vector<8x128xf32>
      %17 = arith.mulf %14, %16 : vector<8x128xf32>
      %c1 = arith.constant 1 : index
      %c0_8 = arith.constant 0 : index
      %18 = vector.load %arg17[%c1, %c0_8] : memref<2x128xf32, #tpu.memory_space<vmem>>, vector<1x128xf32>
      %19 = vector.broadcast %18 : vector<1x128xf32> to vector<8x128xf32>
      %20 = arith.addf %17, %19 : vector<8x128xf32>
      %cst = arith.constant 0.000000e+00 : f32
      %21 = vector.broadcast %cst : f32 to vector<8x128xf32>
      %22 = arith.maximumf %20, %21 : vector<8x128xf32>
      %c0_9 = arith.constant 0 : index
      %c0_10 = arith.constant 0 : index
      %23 = vector.load %arg9[%c0_9, %c0_10] : memref<128x128xf32, #tpu.memory_space<vmem>>, vector<128x128xf32>
      %cst_11 = arith.constant dense<0.000000e+00> : vector<8x128xf32>
      %24 = tpu.matmul %22, %23, %cst_11 {dimension_numbers = #tpu.dot_dimension_numbers<[1], [0], [0], [1], [0, 0, 1, 1], [], []>} : vector<8x128xf32>, vector<128x128xf32>, vector<8x128xf32> -> vector<8x128xf32>
      %c0_12 = arith.constant 0 : index
      %c0_13 = arith.constant 0 : index
      %25 = vector.load %arg10[%c0_12, %c0_13] : memref<1x128xf32, #tpu.memory_space<vmem>>, vector<1x128xf32>
      %26 = vector.broadcast %25 : vector<1x128xf32> to vector<8x128xf32>
      %27 = arith.addf %24, %26 : vector<8x128xf32>
      %c0_14 = arith.constant 0 : index
      %c0_15 = arith.constant 0 : index
      %28 = vector.load %arg11[%c0_14, %c0_15] : memref<8x128xf32, #tpu.memory_space<vmem>>, vector<8x128xf32>
      tpu.vector_store %arg11[%c0_14, %c0_15], %27 {strides = array<i32>} : memref<8x128xf32, #tpu.memory_space<vmem>>, vector<8x128xf32>,
    } else {
    }
    return
  }
  func.func @transform_0(%arg0: i32, %arg1: i32) -> (i32, i32) {
    %c0_i32 = arith.constant 0 : i32
    %0 = arith.cmpi eq, %arg0, %c0_i32 : i32
    %c0_i32_0 = arith.constant 0 : i32
    %1 = arith.select %0, %arg1, %c0_i32_0 : i32
    %c0_i32_1 = arith.constant 0 : i32
    %c0_i32_2 = arith.constant 0 : i32
    return %1, %c0_i32_1 : i32, i32
  }
  func.func @transform_1(%arg0: i32, %arg1: i32) -> (i32, i32) {
    %c0_i32 = arith.constant 0 : i32
    %c0_i32_0 = arith.constant 0 : i32
    %c0_i32_1 = arith.constant 0 : i32
    return %c0_i32, %c0_i32_0 : i32, i32
  }
  func.func @transform_2(%arg0: i32, %arg1: i32) -> (i32, i32) {
    %c0_i32 = arith.constant 0 : i32
    %c0_i32_0 = arith.constant 0 : i32
    %c0_i32_1 = arith.constant 0 : i32
    return %c0_i32, %c0_i32_0 : i32, i32
  }
  func.func @transform_3(%arg0: i32, %arg1: i32) -> (i32, i32) {
    %c0_i32 = arith.constant 0 : i32
    %c0_i32_0 = arith.constant 0 : i32
    %c0_i32_1 = arith.constant 0 : i32
    return %c0_i32, %c0_i32_0 : i32, i32
  }
  func.func @transform_4(%arg0: i32, %arg1: i32) -> (i32, i32) {
    %c0_i32 = arith.constant 0 : i32
    %c0_i32_0 = arith.constant 0 : i32
    %c0_i32_1 = arith.constant 0 : i32
    return %c0_i32, %c0_i32_0 : i32, i32
  }
  func.func @transform_5(%arg0: i32, %arg1: i32) -> (i32, i32) {
    %c0_i32 = arith.constant 0 : i32
    %c0_i32_0 = arith.constant 0 : i32
    %c0_i32_1 = arith.constant 0 : i32
    return %c0_i32, %c0_i32_0 : i32, i32
  }
  func.func @transform_6(%arg0: i32, %arg1: i32) -> (i32, i32) {
    %c0_i32 = arith.constant 0 : i32
    %c0_i32_0 = arith.constant 0 : i32
    %c0_i32_1 = arith.constant 0 : i32
    return %c0_i32, %c0_i32_0 : i32, i32
  }
  func.func @transform_7(%arg0: i32, %arg1: i32) -> (i32, i32) {
    %c0_i32 = arith.constant 0 : i32
    %c0_i32_0 = arith.constant 0 : i32
    %c0_i32_1 = arith.constant 0 : i32
    return %c0_i32, %c0_i32_0 : i32, i32
  }
  func.func @transform_8(%arg0: i32, %arg1: i32) -> (i32, i32) {
    %c0_i32 = arith.constant 0 : i32
    %c0_i32_0 = arith.constant 0 : i32
    %c0_i32_1 = arith.constant 0 : i32
    return %c0_i32, %c0_i32_0 : i32, i32
  }
  func.func @transform_9(%arg0: i32, %arg1: i32) -> (i32, i32) {
    %c2_i32 = arith.constant 2 : i32
    %0 = arith.cmpi eq, %arg0, %c2_i32 : i32
    %c0_i32 = arith.constant 0 : i32
    %1 = arith.select %0, %arg1, %c0_i32 : i32
    %c0_i32_0 = arith.constant 0 : i32
    %c0_i32_1 = arith.constant 0 : i32
    return %1, %c0_i32_0 : i32, i32
  }
}

</mosaic_0001>

<llo_original>
// kernel: tpu_custom_call.1
$region0: #{tpu_custom_call.1}
  #allocation0 [shape = 'u32[]', space=smem, size = 0x4, offset = 0x4, fixed_abs, tag = 'smem constant byte address 0x4 - core index']
  #allocation1 [shape = 'u32[144,128]{1,0:T(1,128)}', space=vmem, size = 0x12000, scoped, tag = 'internal scratch']
  #allocation2 [shape = 'f32[1,8,128]{2,1,0:T(8,128)}', space=vmem, size = 0x1000, scoped, tag = 'scratch operand']
  #allocation3 [shape = 'f32[1,8,128]{2,1,0:T(8,128)}', space=vmem, size = 0x1000, scoped, tag = 'scratch operand']
  #allocation4 [shape = 'f32[2,128]{1,0:T(2,128)}', space=vmem, size = 0x400, scoped, tag = 'scratch operand']
  #allocation5 [shape = 'f32[2,128]{1,0:T(2,128)}', space=vmem, size = 0x400, scoped, tag = 'scratch operand']
  #allocation6 [shape = 'f32[2,128]{1,0:T(2,128)}', space=vmem, size = 0x400, scoped, tag = 'scratch operand']
  #allocation7 [shape = 'f32[2,128]{1,0:T(2,128)}', space=vmem, size = 0x400, scoped, tag = 'scratch operand']
  %s0 = inlined_call_operand.hbm [shape: f32[8,128], index: 0, kind: input, shape index: {}]
  %s1 = inlined_call_operand.hbm [shape: f32[128,128], index: 1, kind: input, shape index: {}]
  %s2 = inlined_call_operand.vmem [shape: f32[1,128], index: 2, kind: input, shape index: {}]
  %s3 = inlined_call_operand.vmem [shape: f32[1,128], index: 3, kind: input, shape index: {}]
  %s4 = inlined_call_operand.hbm [shape: f32[128,128], index: 4, kind: input, shape index: {}]
  %s5 = inlined_call_operand.vmem [shape: f32[1,128], index: 5, kind: input, shape index: {}]
  %s6 = inlined_call_operand.vmem [shape: f32[1,128], index: 6, kind: input, shape index: {}]
  %s7 = inlined_call_operand.hbm [shape: f32[128,128], index: 7, kind: input, shape index: {}]
  %s8 = inlined_call_operand.vmem [shape: f32[1,128], index: 8, kind: input, shape index: {}]
  %s9 = inlined_call_operand.hbm [shape: f32[8,128], index: 9, kind: output, shape index: {}]
  %s10 = sld [smem:[#allocation0]]
  $region109: #{tpu_custom_call.1} parent=0
    _
  %s12 = ssub.s32 1, %s10
  %s13 = scalar_select 0, %s12, %s10
  $region1: #{tpu_custom_call.1} parent=0
    #allocation8 [shape = 'u8[8192]{0}', space=vmem, size = 0x2000, scoped, tag = 'input window, operand 0']
    #allocation9 [shape = 's32[2]{0}', space=sflag, size = 0x8, scoped, tag = 'scoped memory for tpu_custom_call.1']
    #allocation10 [shape = 's32[2]{0}', space=sflag, size = 0x8, scoped, tag = 'scoped memory for tpu_custom_call.1']
    #allocation11 [shape = 'u8[65536]{0}', space=vmem, size = 0x10000, scoped, tag = 'input window, operand 1, single buffered']
    #allocation12 [shape = 's32[1]{0}', space=sflag, size = 0x4, scoped, tag = 'scoped memory for tpu_custom_call.1']
    #allocation13 [shape = 'u8[65536]{0}', space=vmem, size = 0x10000, scoped, tag = 'input window, operand 4, single buffered']
    #allocation14 [shape = 'u8[65536]{0}', space=vmem, size = 0x10000, scoped, tag = 'input window, operand 7, single buffered']
    #allocation15 [shape = 's32[1]{0}', space=sflag, size = 0x4, scoped, tag = 'scoped memory for tpu_custom_call.1']
    #allocation16 [shape = 'u8[8192]{0}', space=vmem, size = 0x2000, scoped, tag = 'output window, operand 0']
    %14 = vsyncpa [#allocation9], 0
    %s15 = scalar_lea.sflag [#allocation9], 1
    %16 = vsyncpa %s15, 0
    %17 = vsyncpa [#allocation12], 0
    %18 = vsyncpa [#allocation15], 0
    %19 = vsyncpa [#allocation10], 0
    %s20 = scalar_lea.sflag [#allocation10], 1
    %21 = vsyncpa %s20, 0
    loop: start=0, step=1, limit=5
    $region2: #{tpu_custom_call.1} parent=1 // loop_pre_header
      _
    $region3: #{tpu_custom_call.1} parent=1 // loop_header
      %s23 = sphi 0, %s27
      %p24 = scmp.ge.s32.totalorder %s23, 5
      %s30 = sphi 0, %s42
      %s31 = sphi 0, %s38
      %s32 = sphi 0, %s30
      %s33 = sphi 0, %s31
      %s34 = sphi 0, %s32
      %s35 = sphi 0, %s33
      %s49 = sphi 0, %s51
      %s52 = sphi 0, %s49
      %s53 = sphi 0, %s52
      %s69 = sphi 0, %s53
      %s73 = sphi 0, %s73
      %s75 = sphi 0, %s73
      %s76 = sphi 0, %s75
      %s90 = sphi 0, %s76
      %s94 = sphi 0, %s94
      %s96 = sphi 0, %s94
      %s97 = sphi 0, %s96
      %s111 = sphi 0, %s97
      %s115 = sphi 0, %s115
      %s117 = sphi 0, %s115
      %s118 = sphi 0, %s117
      %s132 = sphi 0, %s118
      %s136 = sphi 0, %s136
      %s138 = sphi 0, %s136
      %s139 = sphi 0, %s138
      %s153 = sphi 0, %s139
      %s157 = sphi 0, %s157
      %s159 = sphi 0, %s157
      %s160 = sphi 0, %s159
      %s174 = sphi 0, %s160
      %s178 = sphi 0, %s178
      %s180 = sphi 0, %s178
      %s181 = sphi 0, %s180
      %s195 = sphi 0, %s181
      %s199 = sphi 0, %s199
      %s201 = sphi 0, %s199
      %s202 = sphi 0, %s201
      %s216 = sphi 0, %s202
      %s220 = sphi 0, %s220
      %s222 = sphi 0, %s220
      %s223 = sphi 0, %s222
      %s237 = sphi 0, %s223
      %s247 = sphi 0, %s249
      %s250 = sphi 0, %s247
      %s251 = sphi 0, %s250
      %s267 = sphi 0, %s251
    $region4: #{tpu_custom_call.1} parent=1 // loop_header_branch
      %26 = sbr.rel (%p24) target = $region8
    $region5: #{tpu_custom_call.1} parent=1 // loop_body
      %s28 = ssub.s32 %s23, 1
      %s29 = ssub.s32 %s23, 2
      %s36 = sadd.s32 1, %s31
      %p37 = scmp.ge.s32.totalorder %s36, 1
      %s38 = scalar_select %p37, 0, %s36
      %s39 = sadd.s32 1, %s30
      %s40 = scalar_select %p37, %s39, %s30
      %p41 = scmp.ge.s32.totalorder %s40, 3
      %s42 = scalar_select %p41, 0, %s40
      %p43 = scmp.eq.s32.totalorder %s30, 0
      %s44 = scalar_select %p43, %s31, 0
      %p45 = scmp.eq.s32.totalorder %s42, 0
      %s46 = scalar_select %p45, %s38, 0
      %s47 = ssub.s32 %s44, %s46
      %p48 = scmp.eq.s32.totalorder %s47, 0
      %s50 = sadd.s32 %s49, 1
      %s51 = scalar_select %p48, %s49, %s50
      %p54 = pneg %p48
      %p55 = scmp.eq.s32.totalorder %s23, 2
      %p56 = por %p54, %p55
      %p57 = scmp.ne.s32.totalorder %s49, %s52
      %p58 = scmp.eq.s32.totalorder %s23, 0
      %p59 = por %p57, %p58
      %p60 = scmp.ne.s32.totalorder %s49, %s52
      %p61 = scmp.eq.s32.totalorder %s28, 2
      %p62 = por %p60, %p61
      %p63 = scmp.ne.s32.totalorder %s52, %s53
      %p64 = scmp.eq.s32.totalorder %s28, 0
      %p65 = por %p63, %p64
      %p66 = scmp.ne.s32.totalorder %s52, %s53
      %p67 = scmp.eq.s32.totalorder %s29, 2
      %p68 = por %p66, %p67
      %p70 = scmp.ne.s32.totalorder %s53, %s69
      %p71 = scmp.eq.s32.totalorder %s29, 0
      %p72 = por %p70, %p71
      %s74 = sadd.s32 %s73, 1
      %p77 = scmp.eq.s32.totalorder %s23, 2
      %p78 = scmp.ne.s32.totalorder %s73, %s75
      %p79 = scmp.eq.s32.totalorder %s23, 0
      %p80 = por %p78, %p79
      %p81 = scmp.ne.s32.totalorder %s73, %s75
      %p82 = scmp.eq.s32.totalorder %s28, 2
      %p83 = por %p81, %p82
      %p84 = scmp.ne.s32.totalorder %s75, %s76
      %p85 = scmp.eq.s32.totalorder %s28, 0
      %p86 = por %p84, %p85
      %p87 = scmp.ne.s32.totalorder %s75, %s76
      %p88 = scmp.eq.s32.totalorder %s29, 2
      %p89 = por %p87, %p88
      %p91 = scmp.ne.s32.totalorder %s76, %s90
      %p92 = scmp.eq.s32.totalorder %s29, 0
      %p93 = por %p91, %p92
      %s95 = sadd.s32 %s94, 1
      %p98 = scmp.eq.s32.totalorder %s23, 2
      %p99 = scmp.ne.s32.totalorder %s94, %s96
      %p100 = scmp.eq.s32.totalorder %s23, 0
      %p101 = por %p99, %p100
      %p102 = scmp.ne.s32.totalorder %s94, %s96
      %p103 = scmp.eq.s32.totalorder %s28, 2
      %p104 = por %p102, %p103
      %p105 = scmp.ne.s32.totalorder %s96, %s97
      %p106 = scmp.eq.s32.totalorder %s28, 0
      %p107 = por %p105, %p106
      %p108 = scmp.ne.s32.totalorder %s96, %s97
      %p109 = scmp.eq.s32.totalorder %s29, 2
      %p110 = por %p108, %p109
      %p112 = scmp.ne.s32.totalorder %s97, %s111
      %p113 = scmp.eq.s32.totalorder %s29, 0
      %p114 = por %p112, %p113
      %s116 = sadd.s32 %s115, 1
      %p119 = scmp.eq.s32.totalorder %s23, 2
      %p120 = scmp.ne.s32.totalorder %s115, %s117
      %p121 = scmp.eq.s32.totalorder %s23, 0
      %p122 = por %p120, %p121
      %p123 = scmp.ne.s32.totalorder %s115, %s117
      %p124 = scmp.eq.s32.totalorder %s28, 2
      %p125 = por %p123, %p124
      %p126 = scmp.ne.s32.totalorder %s117, %s118
      %p127 = scmp.eq.s32.totalorder %s28, 0
      %p128 = por %p126, %p127
      %p129 = scmp.ne.s32.totalorder %s117, %s118
      %p130 = scmp.eq.s32.totalorder %s29, 2
      %p131 = por %p129, %p130
      %p133 = scmp.ne.s32.totalorder %s118, %s132
      %p134 = scmp.eq.s32.totalorder %s29, 0
      %p135 = por %p133, %p134
      %s137 = sadd.s32 %s136, 1
      %p140 = scmp.eq.s32.totalorder %s23, 2
      %p141 = scmp.ne.s32.totalorder %s136, %s138
      %p142 = scmp.eq.s32.totalorder %s23, 0
      %p143 = por %p141, %p142
      %p144 = scmp.ne.s32.totalorder %s136, %s138
      %p145 = scmp.eq.s32.totalorder %s28, 2
      %p146 = por %p144, %p145
      %p147 = scmp.ne.s32.totalorder %s138, %s139
      %p148 = scmp.eq.s32.totalorder %s28, 0
      %p149 = por %p147, %p148
      %p150 = scmp.ne.s32.totalorder %s138, %s139
      %p151 = scmp.eq.s32.totalorder %s29, 2
      %p152 = por %p150, %p151
      %p154 = scmp.ne.s32.totalorder %s139, %s153
      %p155 = scmp.eq.s32.totalorder %s29, 0
      %p156 = por %p154, %p155
      %s158 = sadd.s32 %s157, 1
      %p161 = scmp.eq.s32.totalorder %s23, 2
      %p162 = scmp.ne.s32.totalorder %s157, %s159
      %p163 = scmp.eq.s32.totalorder %s23, 0
      %p164 = por %p162, %p163
      %p165 = scmp.ne.s32.totalorder %s157, %s159
      %p166 = scmp.eq.s32.totalorder %s28, 2
      %p167 = por %p165, %p166
      %p168 = scmp.ne.s32.totalorder %s159, %s160
      %p169 = scmp.eq.s32.totalorder %s28, 0
      %p170 = por %p168, %p169
      %p171 = scmp.ne.s32.totalorder %s159, %s160
      %p172 = scmp.eq.s32.totalorder %s29, 2
      %p173 = por %p171, %p172
      %p175 = scmp.ne.s32.totalorder %s160, %s174
      %p176 = scmp.eq.s32.totalorder %s29, 0
      %p177 = por %p175, %p176
      %s179 = sadd.s32 %s178, 1
      %p182 = scmp.eq.s32.totalorder %s23, 2
      %p183 = scmp.ne.s32.totalorder %s178, %s180
      %p184 = scmp.eq.s32.totalorder %s23, 0
      %p185 = por %p183, %p184
      %p186 = scmp.ne.s32.totalorder %s178, %s180
      %p187 = scmp.eq.s32.totalorder %s28, 2
      %p188 = por %p186, %p187
      %p189 = scmp.ne.s32.totalorder %s180, %s181
      %p190 = scmp.eq.s32.totalorder %s28, 0
      %p191 = por %p189, %p190
      %p192 = scmp.ne.s32.totalorder %s180, %s181
      %p193 = scmp.eq.s32.totalorder %s29, 2
      %p194 = por %p192, %p193
      %p196 = scmp.ne.s32.totalorder %s181, %s195
      %p197 = scmp.eq.s32.totalorder %s29, 0
      %p198 = por %p196, %p197
      %s200 = sadd.s32 %s199, 1
      %p203 = scmp.eq.s32.totalorder %s23, 2
      %p204 = scmp.ne.s32.totalorder %s199, %s201
      %p205 = scmp.eq.s32.totalorder %s23, 0
      %p206 = por %p204, %p205
      %p207 = scmp.ne.s32.totalorder %s199, %s201
      %p208 = scmp.eq.s32.totalorder %s28, 2
      %p209 = por %p207, %p208
      %p210 = scmp.ne.s32.totalorder %s201, %s202
      %p211 = scmp.eq.s32.totalorder %s28, 0
      %p212 = por %p210, %p211
      %p213 = scmp.ne.s32.totalorder %s201, %s202
      %p214 = scmp.eq.s32.totalorder %s29, 2
      %p215 = por %p213, %p214
      %p217 = scmp.ne.s32.totalorder %s202, %s216
      %p218 = scmp.eq.s32.totalorder %s29, 0
      %p219 = por %p217, %p218
      %s221 = sadd.s32 %s220, 1
      %p224 = scmp.eq.s32.totalorder %s23, 2
      %p225 = scmp.ne.s32.totalorder %s220, %s222
      %p226 = scmp.eq.s32.totalorder %s23, 0
      %p227 = por %p225, %p226
      %p228 = scmp.ne.s32.totalorder %s220, %s222
      %p229 = scmp.eq.s32.totalorder %s28, 2
      %p230 = por %p228, %p229
      %p231 = scmp.ne.s32.totalorder %s222, %s223
      %p232 = scmp.eq.s32.totalorder %s28, 0
      %p233 = por %p231, %p232
      %p234 = scmp.ne.s32.totalorder %s222, %s223
      %p235 = scmp.eq.s32.totalorder %s29, 2
      %p236 = por %p234, %p235
      %p238 = scmp.ne.s32.totalorder %s223, %s237
      %p239 = scmp.eq.s32.totalorder %s29, 0
      %p240 = por %p238, %p239
      %p241 = scmp.eq.s32.totalorder %s30, 2
      %s242 = scalar_select %p241, %s31, 0
      %p243 = scmp.eq.s32.totalorder %s42, 2
      %s244 = scalar_select %p243, %s38, 0
      %s245 = ssub.s32 %s242, %s244
      %p246 = scmp.eq.s32.totalorder %s245, 0
      %s248 = sadd.s32 %s247, 1
      %s249 = scalar_select %p246, %s247, %s248
      %p252 = pneg %p246
      %p253 = scmp.eq.s32.totalorder %s23, 2
      %p254 = por %p252, %p253
      %p255 = scmp.ne.s32.totalorder %s247, %s250
      %p256 = scmp.eq.s32.totalorder %s23, 0
      %p257 = por %p255, %p256
      %p258 = scmp.ne.s32.totalorder %s247, %s250
      %p259 = scmp.eq.s32.totalorder %s28, 2
      %p260 = por %p258, %p259
      %p261 = scmp.ne.s32.totalorder %s250, %s251
      %p262 = scmp.eq.s32.totalorder %s28, 0
      %p263 = por %p261, %p262
      %p264 = scmp.ne.s32.totalorder %s250, %s251
      %p265 = scmp.eq.s32.totalorder %s29, 2
      %p266 = por %p264, %p265
      %p268 = scmp.ne.s32.totalorder %s251, %s267
      %p269 = scmp.eq.s32.totalorder %s29, 0
      %p270 = por %p268, %p269
      %p271 = scmp.le.s32.totalorder 1, %s23
      %p272 = scmp.lt.s32.totalorder %s23, 4
      %p273 = pnand %p271, %p272
      %p274 = pneg %p273
      // Predicated region
      $region9: #{tpu_custom_call.1} parent=5 // pred_check
        _
      $region10: #{tpu_custom_call.1} parent=5 // pred_check_branch
        %276 = sbr.rel (%p273) target = $region12
      $region11: #{tpu_custom_call.1} parent=5 // pred_region
        %s277 = ssub.s32 %s23, 1
        // Predicated region
        $region13: #{tpu_custom_call.1} parent=11 // pred_check
          %p278 = pneg %p86
        $region14: #{tpu_custom_call.1} parent=11 // pred_check_branch
          %280 = sbr.rel (%p278) target = $region16
        $region15: #{tpu_custom_call.1} parent=11 // pred_region
          %s282 = ssub.s32 2048, 2048
          %283 = vsyncadd [#allocation12], %s282
          %s284 = sshll.u32 [#allocation11], 4
          %s285 = int_to_ptr.vmem [resolvable:$true] %s284
          %290 = dma.hbm_to_vmem [thread:$0]  %s1, 2048, %s285, [#allocation12], 128, 128, 8
        $region16: #{tpu_custom_call.1} parent=11 // pred_fallthru
          _
        // Predicated region
        $region17: #{tpu_custom_call.1} parent=11 // pred_check
          %p291 = pneg %p107
        $region18: #{tpu_custom_call.1} parent=11 // pred_check_branch
          %293 = sbr.rel (%p291) target = $region20
        $region19: #{tpu_custom_call.1} parent=11 // pred_region
          _
        $region20: #{tpu_custom_call.1} parent=11 // pred_fallthru
          _
        // Predicated region
        $region21: #{tpu_custom_call.1} parent=11 // pred_check
          %p294 = pneg %p128
        $region22: #{tpu_custom_call.1} parent=11 // pred_check_branch
          %296 = sbr.rel (%p294) target = $region24
        $region23: #{tpu_custom_call.1} parent=11 // pred_region
          _
        $region24: #{tpu_custom_call.1} parent=11 // pred_fallthru
          _
        // Predicated region
        $region25: #{tpu_custom_call.1} parent=11 // pred_check
          %p297 = pneg %p149
        $region26: #{tpu_custom_call.1} parent=11 // pred_check_branch
          %299 = sbr.rel (%p297) target = $region28
        $region27: #{tpu_custom_call.1} parent=11 // pred_region
          %s301 = ssub.s32 2048, 2048
          %302 = vsyncadd [#allocation12], %s301
          %s303 = sshll.u32 [#allocation13], 4
          %s304 = int_to_ptr.vmem [resolvable:$true] %s303
          %309 = dma.hbm_to_vmem [thread:$0]  %s4, 2048, %s304, [#allocation12], 128, 128, 8
        $region28: #{tpu_custom_call.1} parent=11 // pred_fallthru
          _
        // Predicated region
        $region29: #{tpu_custom_call.1} parent=11 // pred_check
          %p310 = pneg %p170
        $region30: #{tpu_custom_call.1} parent=11 // pred_check_branch
          %312 = sbr.rel (%p310) target = $region32
        $region31: #{tpu_custom_call.1} parent=11 // pred_region
          _
        $region32: #{tpu_custom_call.1} parent=11 // pred_fallthru
          _
        // Predicated region
        $region33: #{tpu_custom_call.1} parent=11 // pred_check
          %p313 = pneg %p191
        $region34: #{tpu_custom_call.1} parent=11 // pred_check_branch
          %315 = sbr.rel (%p313) target = $region36
        $region35: #{tpu_custom_call.1} parent=11 // pred_region
          _
        $region36: #{tpu_custom_call.1} parent=11 // pred_fallthru
          _
        // Predicated region
        $region37: #{tpu_custom_call.1} parent=11 // pred_check
          %p316 = pneg %p212
        $region38: #{tpu_custom_call.1} parent=11 // pred_check_branch
          %318 = sbr.rel (%p316) target = $region40
        $region39: #{tpu_custom_call.1} parent=11 // pred_region
          %s320 = ssub.s32 2048, 2048
          %321 = vsyncadd [#allocation15], %s320
          %s322 = sshll.u32 [#allocation14], 4
          %s323 = int_to_ptr.vmem [resolvable:$true] %s322
          %328 = dma.hbm_to_vmem [thread:$0]  %s7, 2048, %s323, [#allocation15], 128, 128, 8
        $region40: #{tpu_custom_call.1} parent=11 // pred_fallthru
          _
        // Predicated region
        $region41: #{tpu_custom_call.1} parent=11 // pred_check
          %p329 = pneg %p233
        $region42: #{tpu_custom_call.1} parent=11 // pred_check_branch
          %331 = sbr.rel (%p329) target = $region44
        $region43: #{tpu_custom_call.1} parent=11 // pred_region
          _
        $region44: #{tpu_custom_call.1} parent=11 // pred_fallthru
          _
      $region12: #{tpu_custom_call.1} parent=5 // pred_fallthru
        _
      %p332 = scmp.lt.s32.totalorder %s23, 3
      // Predicated region
      $region45: #{tpu_custom_call.1} parent=5 // pred_check
        %p333 = pneg %p332
      $region46: #{tpu_custom_call.1} parent=5 // pred_check_branch
        %335 = sbr.rel (%p333) target = $region48
      $region47: #{tpu_custom_call.1} parent=5 // pred_region
        // Predicated region
        $region49: #{tpu_custom_call.1} parent=47 // pred_check
          %p336 = pneg %p59
        $region50: #{tpu_custom_call.1} parent=47 // pred_check_branch
          %338 = sbr.rel (%p336) target = $region52
        $region51: #{tpu_custom_call.1} parent=47 // pred_region
          %s339 = sand.u32 %s49, 1
          %s340 = scalar_lea.sflag [#allocation9], %s339
          %s341 = sand.u32 %s49, 1
          %s342 = smul.addr %s341, 8
          %s343 = scalar_lea.vmem [#allocation8], %s342
          %p344 = scmp.eq.s32.totalorder %s30, 0
          %s345 = scalar_select %p344, %s31, 0
          %s347 = ssub.s32 128, 128
          %348 = vsyncadd %s340, %s347
          %s349 = smul.addr %s345, 128
          %s350 = scalar_lea.hbm %s0, %s349
          %s352 = sshll.u32 %s343, 4
          %s353 = int_to_ptr.vmem [resolvable:$true] %s352
          %355 = dma.hbm_to_vmem [thread:$0]  %s350, 128, %s353, %s340
        $region52: #{tpu_custom_call.1} parent=47 // pred_fallthru
          _
      $region48: #{tpu_custom_call.1} parent=5 // pred_fallthru
        _
      %p356 = scmp.le.s32.totalorder 1, %s23
      %p357 = scmp.lt.s32.totalorder %s23, 4
      %p358 = pnand %p356, %p357
      %p359 = pneg %p358
      // Predicated region
      $region53: #{tpu_custom_call.1} parent=5 // pred_check
        _
      $region54: #{tpu_custom_call.1} parent=5 // pred_check_branch
        %361 = sbr.rel (%p358) target = $region56
      $region55: #{tpu_custom_call.1} parent=5 // pred_region
        %s362 = ssub.s32 %s23, 1
        %s363 = sand.u32 %s52, 1
        %s364 = scalar_lea.sflag [#allocation9], %s363
        %s365 = sand.u32 %s52, 1
        %s366 = smul.addr %s365, 8
        %s367 = scalar_lea.vmem [#allocation8], %s366
        // Predicated region
        $region57: #{tpu_custom_call.1} parent=55 // pred_check
          %p368 = pneg %p65
        $region58: #{tpu_custom_call.1} parent=55 // pred_check_branch
          %370 = sbr.rel (%p368) target = $region60
        $region59: #{tpu_custom_call.1} parent=55 // pred_region
          %371 = dma.done %s364, 128
        $region60: #{tpu_custom_call.1} parent=55 // pred_fallthru
          _
        // Predicated region
        $region61: #{tpu_custom_call.1} parent=55 // pred_check
          %p372 = pneg %p86
        $region62: #{tpu_custom_call.1} parent=55 // pred_check_branch
          %374 = sbr.rel (%p372) target = $region64
        $region63: #{tpu_custom_call.1} parent=55 // pred_region
          %375 = dma.done [#allocation12], 2048
        $region64: #{tpu_custom_call.1} parent=55 // pred_fallthru
          _
        // Predicated region
        $region65: #{tpu_custom_call.1} parent=55 // pred_check
          %p376 = pneg %p149
        $region66: #{tpu_custom_call.1} parent=55 // pred_check_branch
          %378 = sbr.rel (%p376) target = $region68
        $region67: #{tpu_custom_call.1} parent=55 // pred_region
          %379 = dma.done [#allocation12], 2048
        $region68: #{tpu_custom_call.1} parent=55 // pred_fallthru
          _
        // Predicated region
        $region69: #{tpu_custom_call.1} parent=55 // pred_check
          %p380 = pneg %p212
        $region70: #{tpu_custom_call.1} parent=55 // pred_check_branch
          %382 = sbr.rel (%p380) target = $region72
        $region71: #{tpu_custom_call.1} parent=55 // pred_region
          %383 = dma.done [#allocation15], 2048
        $region72: #{tpu_custom_call.1} parent=55 // pred_fallthru
          _
        %s384 = sand.u32 %s52, 1
        %s385 = scalar_lea.sflag [#allocation9], %s384
        %s386 = sand.u32 %s52, 1
        %s387 = smul.addr %s386, 8
        %s388 = scalar_lea.vmem [#allocation8], %s387
        %p389 = pneg %p65
        %p390 = pneg %p62
        %p391 = pneg %p86
        %p392 = pneg %p83
        %p393 = pneg %p107
        %p394 = pneg %p104
        %p395 = pneg %p128
        %p396 = pneg %p125
        %p397 = pneg %p149
        %p398 = pneg %p146
        %p399 = pneg %p170
        %p400 = pneg %p167
        %p401 = pneg %p191
        %p402 = pneg %p188
        %p403 = pneg %p212
        %p404 = pneg %p209
        %p405 = pneg %p233
        %p406 = pneg %p230
        %p407 = pneg %p263
        %p408 = pneg %p260
        %s409 = sand.u32 %s250, 1
        %s410 = scalar_lea.sflag [#allocation10], %s409
        %s411 = sand.u32 %s250, 1
        %s412 = smul.addr %s411, 8
        %s413 = scalar_lea.vmem [#allocation16], %s412
        %p414 = scmp.eq.s32.totalorder %s32, 0
        %s415 = scalar_select %p414, %s33, 0
        %p416 = scmp.eq.s32.totalorder %s32, 2
        %s417 = scalar_select %p416, %s33, 0
        %p418 = scmp.eq.s32.totalorder %s32, 0
        // Predicated region
        $region73: #{tpu_custom_call.1} parent=55 // pred_check
          %p419 = pneg %p418
        $region74: #{tpu_custom_call.1} parent=55 // pred_check_branch
          %421 = sbr.rel (%p419) target = $region76
        $region75: #{tpu_custom_call.1} parent=55 // pred_region
          %p422 = scmp.eq.s32.totalorder %s33, 0
          // Predicated region
          $region77: #{tpu_custom_call.1} parent=75 // pred_check
            %p423 = pneg %p422
          $region78: #{tpu_custom_call.1} parent=75 // pred_check_branch
            %425 = sbr.rel (%p423) target = $region80
          $region79: #{tpu_custom_call.1} parent=75 // pred_region
            %426 = vst [vmem:[#allocation4] sm:$0x3] 0.0
            %427 = vst [vmem:[#allocation5] sm:$0x3] 0.0
          $region80: #{tpu_custom_call.1} parent=75 // pred_fallthru
            _
          %v428 = vld [vmem:[%s367] sm:$0xff]
          %v429 = vld [vmem:[#allocation11] sm:$0xff]
          %v430 = vld [vmem:[#allocation11 + $0x8] sm:$0xff]
          %v431 = vld [vmem:[#allocation11 + $0x10] sm:$0xff]
          %v432 = vld [vmem:[#allocation11 + $0x18] sm:$0xff]
          %v433 = vld [vmem:[#allocation11 + $0x20] sm:$0xff]
          %v434 = vld [vmem:[#allocation11 + $0x28] sm:$0xff]
          %v435 = vld [vmem:[#allocation11 + $0x30] sm:$0xff]
          %v436 = vld [vmem:[#allocation11 + $0x38] sm:$0xff]
          %v437 = vld [vmem:[#allocation11 + $0x40] sm:$0xff]
          %v438 = vld [vmem:[#allocation11 + $0x48] sm:$0xff]
          %v439 = vld [vmem:[#allocation11 + $0x50] sm:$0xff]
          %v440 = vld [vmem:[#allocation11 + $0x58] sm:$0xff]
          %v441 = vld [vmem:[#allocation11 + $0x60] sm:$0xff]
          %v442 = vld [vmem:[#allocation11 + $0x68] sm:$0xff]
          %v443 = vld [vmem:[#allocation11 + $0x70] sm:$0xff]
          %v444 = vld [vmem:[#allocation11 + $0x78] sm:$0xff]
          %445 = vmatprep.subr.mxu0 0.0
          %446 = vmatpush1.msra.mxu0 %v444
          %447 = vmatprep.subr.mxu0 0.0
          %448 = vmatpush1.msra.mxu0 %v443
          %449 = vmatprep.subr.mxu0 0.0
          %450 = vmatpush1.msra.mxu0 %v442
          %451 = vmatprep.subr.mxu0 0.0
          %452 = vmatpush1.msra.mxu0 %v441
          %453 = vmatprep.subr.mxu0 0.0
          %454 = vmatpush1.msra.mxu0 %v440
          %455 = vmatprep.subr.mxu0 0.0
          %456 = vmatpush1.msra.mxu0 %v439
          %457 = vmatprep.subr.mxu0 0.0
          %458 = vmatpush1.msra.mxu0 %v438
          %459 = vmatprep.subr.mxu0 0.0
          %460 = vmatpush1.msra.mxu0 %v437
          %461 = vmatprep.subr.mxu0 0.0
          %462 = vmatpush1.msra.mxu0 %v436
          %463 = vmatprep.subr.mxu0 0.0
          %464 = vmatpush1.msra.mxu0 %v435
          %465 = vmatprep.subr.mxu0 0.0
          %466 = vmatpush1.msra.mxu0 %v434
          %467 = vmatprep.subr.mxu0 0.0
          %468 = vmatpush1.msra.mxu0 %v433
          %469 = vmatprep.subr.mxu0 0.0
          %470 = vmatpush1.msra.mxu0 %v432
          %471 = vmatprep.subr.mxu0 0.0
          %472 = vmatpush1.msra.mxu0 %v431
          %473 = vmatprep.subr.mxu0 0.0
          %474 = vmatpush1.msra.mxu0 %v430
          %475 = vmatprep.subr.mxu0 0.0
          %476 = vmatpush1.msra.mxu0 %v429
          %477 = vmatprep.subr.mxu0 0.0
          %478 = vmatpush2.msra.mxu0 0.0
          %479 = vmatprep.subr.mxu0 0.0
          %480 = vmatpush2.msra.mxu0 0.0
          %481 = vmatprep.subr.mxu0 0.0
          %482 = vmatpush2.msra.mxu0 0.0
          %483 = vmatprep.subr.mxu0 0.0
          %484 = vmatpush2.msra.mxu0 0.0
          %485 = vmatprep.subr.mxu0 0.0
          %486 = vmatpush2.msra.mxu0 0.0
          %487 = vmatprep.subr.mxu0 0.0
          %488 = vmatpush2.msra.mxu0 0.0
          %489 = vmatprep.subr.mxu0 0.0
          %490 = vmatpush2.msra.mxu0 0.0
          %491 = vmatprep.subr.mxu0 0.0
          %492 = vmatpush2.msra.mxu0 0.0
          %493 = vmatprep.subr.mxu0 0.0
          %494 = vmatpush2.msra.mxu0 0.0
          %495 = vmatprep.subr.mxu0 0.0
          %496 = vmatpush2.msra.mxu0 0.0
          %497 = vmatprep.subr.mxu0 0.0
          %498 = vmatpush2.msra.mxu0 0.0
          %499 = vmatprep.subr.mxu0 0.0
          %500 = vmatpush2.msra.mxu0 0.0
          %501 = vmatprep.subr.mxu0 0.0
          %502 = vmatpush2.msra.mxu0 0.0
          %503 = vmatprep.subr.mxu0 0.0
          %504 = vmatpush2.msra.mxu0 0.0
          %505 = vmatprep.subr.mxu0 0.0
          %506 = vmatpush2.msra.mxu0 0.0
          %507 = vmatprep.subr.mxu0 0.0
          %508 = vmatpush2.msra.mxu0 0.0
          %509 = vmatprep.mubr.f32.mxu0 0.0
          %510 = vmatmul.mubr.f32.gmra.mxu0 %v428
          %v511 = vpop.f32.mrf.mxu0
          %v512 = vadd.f32 0.0, %v511
          %v513 = vpop.f32.mrf.mxu0
          %514 = vdwg.mxu0
          %v515 = vld [vmem:[#allocation4] sm:$0x1]
          %v516 = vrot.slane %v512, 4
          %v517 = vadd.f32 %v512, %v516
          %v518 = vrot.slane %v517, 2
          %v519 = vadd.f32 %v517, %v518
          %v520 = vrot.slane %v519, 1
          %v521 = vadd.f32 %v519, %v520
          %v522 = vadd.f32 %v515, %v521
          %523 = vst [vmem:[#allocation4] sm:$0x1] %v522
          %v524 = vld [vmem:[#allocation4 + $0x1] sm:$0x1]
          %v525 = vmul.f32 %v512, %v512
          %v526 = vrot.slane %v525, 4
          %v527 = vadd.f32 %v525, %v526
          %v528 = vrot.slane %v527, 2
          %v529 = vadd.f32 %v527, %v528
          %v530 = vrot.slane %v529, 1
          %v531 = vadd.f32 %v529, %v530
          %v532 = vadd.f32 %v524, %v531
          %533 = vst [vmem:[#allocation4 + $0x1] sm:$0x1] %v532
          %s534 = smul.u32 %s33, 8
          %s535 = scalar_lea.vmem [#allocation2], %s534
          %536 = vst [vmem:[%s535] sm:$0xff] %v512
        $region76: #{tpu_custom_call.1} parent=55 // pred_fallthru
          _
        %p537 = scmp.eq.s32.totalorder %s32, 1
        // Predicated region
        $region81: #{tpu_custom_call.1} parent=55 // pred_check
          %p538 = pneg %p537
        $region82: #{tpu_custom_call.1} parent=55 // pred_check_branch
          %540 = sbr.rel (%p538) target = $region84
        $region83: #{tpu_custom_call.1} parent=55 // pred_region
          %p541 = scmp.eq.s32.totalorder %s33, 0
          // Predicated region
          $region85: #{tpu_custom_call.1} parent=83 // pred_check
            %p542 = pneg %p541
          $region86: #{tpu_custom_call.1} parent=83 // pred_check_branch
            %544 = sbr.rel (%p542) target = $region88
          $region87: #{tpu_custom_call.1} parent=83 // pred_region
            %v545 = vld [vmem:[#allocation4] sm:$0x1]
            %v546 = vmul.f32 %v545, 0.125
            %v547 = vld [vmem:[#allocation4 + $0x1] sm:$0x1]
            %v548 = vmul.f32 %v547, 0.125
            %v549 = vmul.f32 %v546, %v546
            %v550 = vsub.f32 %v548, %v549
            %v551 = vmax.f32 %v550, 0.0
            %v552 = vld [vmem:[%s2] sm:$0x1]
            %v553 = vadd.f32 %v551, 1e-05
            %v554 = vrsqrt.pop %v553
            %v555 = vmul.f32 %v552, %v554
            %556 = vst [vmem:[#allocation6] sm:$0x1] %v555
            %v557 = vld [vmem:[%s3] sm:$0x1]
            %v558 = vmul.f32 %v546, %v555
            %v559 = vsub.f32 %v557, %v558
            %560 = vst [vmem:[#allocation6 + $0x1] sm:$0x1] %v559
          $region88: #{tpu_custom_call.1} parent=83 // pred_fallthru
            _
          %s561 = smul.u32 %s33, 8
          %s562 = scalar_lea.vmem [#allocation2], %s561
          %v563 = vld [vmem:[%s562] sm:$0xff]
          %v564 = vld [vmem:[#allocation6] sm:$0x1]
          %v565 = vlaneseq
          %v566 = vshrl.u32 %v565, 7
          %v567 = vsub.s32 0, %v566
          %v568 = vrot.slane %v564, %v567
          %v569 = vmul.f32 %v563, %v568
          %v570 = vld [vmem:[#allocation6 + $0x1] sm:$0x1]
          %v571 = vlaneseq
          %v572 = vshrl.u32 %v571, 7
          %v573 = vsub.s32 0, %v572
          %v574 = vrot.slane %v570, %v573
          %v575 = vadd.f32 %v569, %v574
          %v576 = vmax.f32 %v575, 0.0
          %v577 = vld [vmem:[#allocation13] sm:$0xff]
          %v578 = vld [vmem:[#allocation13 + $0x8] sm:$0xff]
          %v579 = vld [vmem:[#allocation13 + $0x10] sm:$0xff]
          %v580 = vld [vmem:[#allocation13 + $0x18] sm:$0xff]
          %v581 = vld [vmem:[#allocation13 + $0x20] sm:$0xff]
          %v582 = vld [vmem:[#allocation13 + $0x28] sm:$0xff]
          %v583 = vld [vmem:[#allocation13 + $0x30] sm:$0xff]
          %v584 = vld [vmem:[#allocation13 + $0x38] sm:$0xff]
          %v585 = vld [vmem:[#allocation13 + $0x40] sm:$0xff]
          %v586 = vld [vmem:[#allocation13 + $0x48] sm:$0xff]
          %v587 = vld [vmem:[#allocation13 + $0x50] sm:$0xff]
          %v588 = vld [vmem:[#allocation13 + $0x58] sm:$0xff]
          %v589 = vld [vmem:[#allocation13 + $0x60] sm:$0xff]
          %v590 = vld [vmem:[#allocation13 + $0x68] sm:$0xff]
          %v591 = vld [vmem:[#allocation13 + $0x70] sm:$0xff]
          %v592 = vld [vmem:[#allocation13 + $0x78] sm:$0xff]
          %593 = vmatprep.subr.mxu0 0.0
          %594 = vmatpush1.msra.mxu0 %v592
          %595 = vmatprep.subr.mxu0 0.0
          %596 = vmatpush1.msra.mxu0 %v591
          %597 = vmatprep.subr.mxu0 0.0
          %598 = vmatpush1.msra.mxu0 %v590
          %599 = vmatprep.subr.mxu0 0.0
          %600 = vmatpush1.msra.mxu0 %v589
          %601 = vmatprep.subr.mxu0 0.0
          %602 = vmatpush1.msra.mxu0 %v588
          %603 = vmatprep.subr.mxu0 0.0
          %604 = vmatpush1.msra.mxu0 %v587
          %605 = vmatprep.subr.mxu0 0.0
          %606 = vmatpush1.msra.mxu0 %v586
          %607 = vmatprep.subr.mxu0 0.0
          %608 = vmatpush1.msra.mxu0 %v585
          %609 = vmatprep.subr.mxu0 0.0
          %610 = vmatpush1.msra.mxu0 %v584
          %611 = vmatprep.subr.mxu0 0.0
          %612 = vmatpush1.msra.mxu0 %v583
          %613 = vmatprep.subr.mxu0 0.0
          %614 = vmatpush1.msra.mxu0 %v582
          %615 = vmatprep.subr.mxu0 0.0
          %616 = vmatpush1.msra.mxu0 %v581
          %617 = vmatprep.subr.mxu0 0.0
          %618 = vmatpush1.msra.mxu0 %v580
          %619 = vmatprep.subr.mxu0 0.0
          %620 = vmatpush1.msra.mxu0 %v579
          %621 = vmatprep.subr.mxu0 0.0
          %622 = vmatpush1.msra.mxu0 %v578
          %623 = vmatprep.subr.mxu0 0.0
          %624 = vmatpush1.msra.mxu0 %v577
          %625 = vmatprep.subr.mxu0 0.0
          %626 = vmatpush2.msra.mxu0 0.0
          %627 = vmatprep.subr.mxu0 0.0
          %628 = vmatpush2.msra.mxu0 0.0
          %629 = vmatprep.subr.mxu0 0.0
          %630 = vmatpush2.msra.mxu0 0.0
          %631 = vmatprep.subr.mxu0 0.0
          %632 = vmatpush2.msra.mxu0 0.0
          %633 = vmatprep.subr.mxu0 0.0
          %634 = vmatpush2.msra.mxu0 0.0
          %635 = vmatprep.subr.mxu0 0.0
          %636 = vmatpush2.msra.mxu0 0.0
          %637 = vmatprep.subr.mxu0 0.0
          %638 = vmatpush2.msra.mxu0 0.0
          %639 = vmatprep.subr.mxu0 0.0
          %640 = vmatpush2.msra.mxu0 0.0
          %641 = vmatprep.subr.mxu0 0.0
          %642 = vmatpush2.msra.mxu0 0.0
          %643 = vmatprep.subr.mxu0 0.0
          %644 = vmatpush2.msra.mxu0 0.0
          %645 = vmatprep.subr.mxu0 0.0
          %646 = vmatpush2.msra.mxu0 0.0
          %647 = vmatprep.subr.mxu0 0.0
          %648 = vmatpush2.msra.mxu0 0.0
          %649 = vmatprep.subr.mxu0 0.0
          %650 = vmatpush2.msra.mxu0 0.0
          %651 = vmatprep.subr.mxu0 0.0
          %652 = vmatpush2.msra.mxu0 0.0
          %653 = vmatprep.subr.mxu0 0.0
          %654 = vmatpush2.msra.mxu0 0.0
          %655 = vmatprep.subr.mxu0 0.0
          %656 = vmatpush2.msra.mxu0 0.0
          %657 = vmatprep.mubr.f32.mxu0 0.0
          %658 = vmatmul.mubr.f32.gmra.mxu0 %v576
          %v659 = vpop.f32.mrf.mxu0
          %v660 = vadd.f32 0.0, %v659
          %v661 = vpop.f32.mrf.mxu0
          %662 = vdwg.mxu0
          %v663 = vld [vmem:[#allocation5] sm:$0x1]
          %v664 = vrot.slane %v660, 4
          %v665 = vadd.f32 %v660, %v664
          %v666 = vrot.slane %v665, 2
          %v667 = vadd.f32 %v665, %v666
          %v668 = vrot.slane %v667, 1
          %v669 = vadd.f32 %v667, %v668
          %v670 = vadd.f32 %v663, %v669
          %671 = vst [vmem:[#allocation5] sm:$0x1] %v670
          %v672 = vld [vmem:[#allocation5 + $0x1] sm:$0x1]
          %v673 = vmul.f32 %v660, %v660
          %v674 = vrot.slane %v673, 4
          %v675 = vadd.f32 %v673, %v674
          %v676 = vrot.slane %v675, 2
          %v677 = vadd.f32 %v675, %v676
          %v678 = vrot.slane %v677, 1
          %v679 = vadd.f32 %v677, %v678
          %v680 = vadd.f32 %v672, %v679
          %681 = vst [vmem:[#allocation5 + $0x1] sm:$0x1] %v680
          %s682 = scalar_lea.vmem [#allocation3], %s561
          %683 = vst [vmem:[%s682] sm:$0xff] %v660
        $region84: #{tpu_custom_call.1} parent=55 // pred_fallthru
          _
        %p684 = scmp.eq.s32.totalorder %s32, 2
        // Predicated region
        $region89: #{tpu_custom_call.1} parent=55 // pred_check
          %p685 = pneg %p684
        $region90: #{tpu_custom_call.1} parent=55 // pred_check_branch
          %687 = sbr.rel (%p685) target = $region92
        $region91: #{tpu_custom_call.1} parent=55 // pred_region
          %p688 = scmp.eq.s32.totalorder %s33, 0
          // Predicated region
          $region93: #{tpu_custom_call.1} parent=91 // pred_check
            %p689 = pneg %p688
          $region94: #{tpu_custom_call.1} parent=91 // pred_check_branch
            %691 = sbr.rel (%p689) target = $region96
          $region95: #{tpu_custom_call.1} parent=91 // pred_region
            %v692 = vld [vmem:[#allocation5] sm:$0x1]
            %v693 = vmul.f32 %v692, 0.125
            %v694 = vld [vmem:[#allocation5 + $0x1] sm:$0x1]
            %v695 = vmul.f32 %v694, 0.125
            %v696 = vmul.f32 %v693, %v693
            %v697 = vsub.f32 %v695, %v696
            %v698 = vmax.f32 %v697, 0.0
            %v699 = vld [vmem:[%s5] sm:$0x1]
            %v700 = vadd.f32 %v698, 1e-05
            %v701 = vrsqrt.pop %v700
            %v702 = vmul.f32 %v699, %v701
            %703 = vst [vmem:[#allocation7] sm:$0x1] %v702
            %v704 = vld [vmem:[%s6] sm:$0x1]
            %v705 = vmul.f32 %v693, %v702
            %v706 = vsub.f32 %v704, %v705
            %707 = vst [vmem:[#allocation7 + $0x1] sm:$0x1] %v706
          $region96: #{tpu_custom_call.1} parent=91 // pred_fallthru
            _
          %s708 = smul.u32 %s33, 8
          %s709 = scalar_lea.vmem [#allocation3], %s708
          %v710 = vld [vmem:[%s709] sm:$0xff]
          %v711 = vld [vmem:[#allocation7] sm:$0x1]
          %v712 = vlaneseq
          %v713 = vshrl.u32 %v712, 7
          %v714 = vsub.s32 0, %v713
          %v715 = vrot.slane %v711, %v714
          %v716 = vmul.f32 %v710, %v715
          %v717 = vld [vmem:[#allocation7 + $0x1] sm:$0x1]
          %v718 = vlaneseq
          %v719 = vshrl.u32 %v718, 7
          %v720 = vsub.s32 0, %v719
          %v721 = vrot.slane %v717, %v720
          %v722 = vadd.f32 %v716, %v721
          %v723 = vmax.f32 %v722, 0.0
          %v724 = vld [vmem:[#allocation14] sm:$0xff]
          %v725 = vld [vmem:[#allocation14 + $0x8] sm:$0xff]
          %v726 = vld [vmem:[#allocation14 + $0x10] sm:$0xff]
          %v727 = vld [vmem:[#allocation14 + $0x18] sm:$0xff]
          %v728 = vld [vmem:[#allocation14 + $0x20] sm:$0xff]
          %v729 = vld [vmem:[#allocation14 + $0x28] sm:$0xff]
          %v730 = vld [vmem:[#allocation14 + $0x30] sm:$0xff]
          %v731 = vld [vmem:[#allocation14 + $0x38] sm:$0xff]
          %v732 = vld [vmem:[#allocation14 + $0x40] sm:$0xff]
          %v733 = vld [vmem:[#allocation14 + $0x48] sm:$0xff]
          %v734 = vld [vmem:[#allocation14 + $0x50] sm:$0xff]
          %v735 = vld [vmem:[#allocation14 + $0x58] sm:$0xff]
          %v736 = vld [vmem:[#allocation14 + $0x60] sm:$0xff]
          %v737 = vld [vmem:[#allocation14 + $0x68] sm:$0xff]
          %v738 = vld [vmem:[#allocation14 + $0x70] sm:$0xff]
          %v739 = vld [vmem:[#allocation14 + $0x78] sm:$0xff]
          %v740 = vld [vmem:[%s8] sm:$0x1]
          %v742 = vlaneseq
          %v743 = vshrl.u32 %v742, 7
          %v744 = vsub.s32 0, %v743
          %v745 = vrot.slane %v740, %v744
          %747 = vmatprep.subr.mxu0 0.0
          %748 = vmatpush1.msra.mxu0 %v739
          %749 = vmatprep.subr.mxu0 0.0
          %750 = vmatpush1.msra.mxu0 %v738
          %751 = vmatprep.subr.mxu0 0.0
          %752 = vmatpush1.msra.mxu0 %v737
          %753 = vmatprep.subr.mxu0 0.0
          %754 = vmatpush1.msra.mxu0 %v736
          %755 = vmatprep.subr.mxu0 0.0
          %756 = vmatpush1.msra.mxu0 %v735
          %757 = vmatprep.subr.mxu0 0.0
          %758 = vmatpush1.msra.mxu0 %v734
          %759 = vmatprep.subr.mxu0 0.0
          %760 = vmatpush1.msra.mxu0 %v733
          %761 = vmatprep.subr.mxu0 0.0
          %762 = vmatpush1.msra.mxu0 %v732
          %763 = vmatprep.subr.mxu0 0.0
          %764 = vmatpush1.msra.mxu0 %v731
          %765 = vmatprep.subr.mxu0 0.0
          %766 = vmatpush1.msra.mxu0 %v730
          %767 = vmatprep.subr.mxu0 0.0
          %768 = vmatpush1.msra.mxu0 %v729
          %769 = vmatprep.subr.mxu0 0.0
          %770 = vmatpush1.msra.mxu0 %v728
          %771 = vmatprep.subr.mxu0 0.0
          %772 = vmatpush1.msra.mxu0 %v727
          %773 = vmatprep.subr.mxu0 0.0
          %774 = vmatpush1.msra.mxu0 %v726
          %775 = vmatprep.subr.mxu0 0.0
          %776 = vmatpush1.msra.mxu0 %v725
          %777 = vmatprep.subr.mxu0 0.0
          %778 = vmatpush1.msra.mxu0 %v724
          %779 = vmatprep.subr.mxu0 0.0
          %780 = vmatpush2.msra.mxu0 0.0
          %781 = vmatprep.subr.mxu0 0.0
          %782 = vmatpush2.msra.mxu0 0.0
          %783 = vmatprep.subr.mxu0 0.0
          %784 = vmatpush2.msra.mxu0 0.0
          %785 = vmatprep.subr.mxu0 0.0
          %786 = vmatpush2.msra.mxu0 0.0
          %787 = vmatprep.subr.mxu0 0.0
          %788 = vmatpush2.msra.mxu0 0.0
          %789 = vmatprep.subr.mxu0 0.0
          %790 = vmatpush2.msra.mxu0 0.0
          %791 = vmatprep.subr.mxu0 0.0
          %792 = vmatpush2.msra.mxu0 0.0
          %793 = vmatprep.subr.mxu0 0.0
          %794 = vmatpush2.msra.mxu0 0.0
          %795 = vmatprep.subr.mxu0 0.0
          %796 = vmatpush2.msra.mxu0 0.0
          %797 = vmatprep.subr.mxu0 0.0
          %798 = vmatpush2.msra.mxu0 0.0
          %799 = vmatprep.subr.mxu0 0.0
          %800 = vmatpush2.msra.mxu0 0.0
          %801 = vmatprep.subr.mxu0 0.0
          %802 = vmatpush2.msra.mxu0 0.0
          %803 = vmatprep.subr.mxu0 0.0
          %804 = vmatpush2.msra.mxu0 0.0
          %805 = vmatprep.subr.mxu0 0.0
          %806 = vmatpush2.msra.mxu0 0.0
          %807 = vmatprep.subr.mxu0 0.0
          %808 = vmatpush2.msra.mxu0 0.0
          %809 = vmatprep.subr.mxu0 0.0
          %810 = vmatpush2.msra.mxu0 0.0
          %811 = vmatprep.mubr.f32.mxu0 0.0
          %812 = vmatmul.mubr.f32.gmra.mxu0 %v723
          %v813 = vpop.f32.mrf.mxu0
          %v814 = vadd.f32 %v745, %v813
          %v815 = vpop.f32.mrf.mxu0
          %816 = vdwg.mxu0
          %817 = vst [vmem:[%s413] sm:$0xff] %v814
        $region92: #{tpu_custom_call.1} parent=55 // pred_fallthru
          _
        %s818 = sand.u32 %s250, 1
        %s819 = scalar_lea.sflag [#allocation10], %s818
        %s820 = sand.u32 %s250, 1
        %s821 = smul.addr %s820, 8
        %s822 = scalar_lea.vmem [#allocation16], %s821
        // Predicated region
        $region97: #{tpu_custom_call.1} parent=55 // pred_check
          %p823 = pneg %p260
        $region98: #{tpu_custom_call.1} parent=55 // pred_check_branch
          %825 = sbr.rel (%p823) target = $region100
        $region99: #{tpu_custom_call.1} parent=55 // pred_region
          %p826 = scmp.eq.s32.totalorder %s32, 2
          %s827 = scalar_select %p826, %s33, 0
          %s829 = ssub.s32 128, 128
          %830 = vsyncadd %s819, %s829
          %s831 = smul.addr %s827, 128
          %s832 = scalar_lea.hbm %s9, %s831
          %s834 = sshll.u32 %s822, 4
          %s835 = int_to_ptr.vmem [resolvable:$true] %s834
          %837 = dma.vmem_to_hbm [thread:$0]  %s835, 128, %s832, %s819
        $region100: #{tpu_custom_call.1} parent=55 // pred_fallthru
          _
      $region56: #{tpu_custom_call.1} parent=5 // pred_fallthru
        _
      %p838 = scmp.le.s32.totalorder 2, %s23
      // Predicated region
      $region101: #{tpu_custom_call.1} parent=5 // pred_check
        %p839 = pneg %p838
      $region102: #{tpu_custom_call.1} parent=5 // pred_check_branch
        %841 = sbr.rel (%p839) target = $region104
      $region103: #{tpu_custom_call.1} parent=5 // pred_region
        %s842 = ssub.s32 %s23, 2
        // Predicated region
        $region105: #{tpu_custom_call.1} parent=103 // pred_check
          %p843 = pneg %p266
        $region106: #{tpu_custom_call.1} parent=103 // pred_check_branch
          %845 = sbr.rel (%p843) target = $region108
        $region107: #{tpu_custom_call.1} parent=103 // pred_region
          %s846 = sand.u32 %s251, 1
          %s847 = scalar_lea.sflag [#allocation10], %s846
          %s848 = sand.u32 %s251, 1
          %s849 = smul.addr %s848, 8
          %s850 = scalar_lea.vmem [#allocation16], %s849
          %851 = dma.done %s847, 128
        $region108: #{tpu_custom_call.1} parent=103 // pred_fallthru
          _
      $region104: #{tpu_custom_call.1} parent=5 // pred_fallthru
        _
    $region6: #{tpu_custom_call.1} parent=1 // loop_footer
      %s27 = sadd.s32 1, %s23
    $region7: #{tpu_custom_call.1} parent=1 // loop_footer_branch
      %22 = sbr.rel target = $region3
    $region8: #{tpu_custom_call.1} parent=1 // loop_exit
      _
    %852 = vsyncpa [#allocation9], 1
    %s853 = scalar_lea.sflag [#allocation9], 1
    %854 = vsyncpa %s853, 1
    %855 = vsyncpa [#allocation12], 1
    %856 = vsyncpa [#allocation15], 1
    %857 = vsyncpa [#allocation10], 1
    %s858 = scalar_lea.sflag [#allocation10], 1
    %859 = vsyncpa %s858, 1

</llo_original>
